<compile_context>
chip_gen: v6e
topology: v6e:2x2x1
jax: 0.10.0
libtpu: 0.0.40
codegen_flags: <defaults>
</compile_context>

<pallas_src>
import jax
import jax.numpy as jnp
from jax.experimental import pallas as pl
from jax.experimental.pallas import tpu as pltpu

LANE = 128  # TPU lane width


def _round_up(n, m):
    return ((n + m - 1) // m) * m


def decoder_kernel(x_ref, w1_ref, b1_ref, w2_ref, b2_ref, mu_ref):
    # linear1 + ReLU  (MXU matmul, f32 accumulation)
    h = jnp.dot(x_ref[...], w1_ref[...], preferred_element_type=jnp.float32)
    h = jnp.maximum(h + b1_ref[...], 0.0)            # (TB,Hp) + (1,Hp) broadcast

    # linear2 + tanh epilogue (EUP); store only the real D_out columns.
    z = jnp.dot(h.astype(w2_ref.dtype), w2_ref[...],
                preferred_element_type=jnp.float32)  # (TB, D_out)
    mu_ref[...] = jnp.tanh(z + b2_ref[...]).astype(mu_ref.dtype)


def decoder_forward(x, w1, b1, w2, b2, *, block_b=1024,
                    compute_dtype=jnp.bfloat16, out_dtype=None):
    """Returns (mu, scale) — parameters of Normal(mu, 1). scale is a scalar 1.0.

    x: (B, D_in); w1: (D_in, H); b1: (1, H) or (H,); w2: (H, D_out); b2: (1, D_out) or (D_out,).
    """
    B, D_in = x.shape
    H = w1.shape[1]
    D_out = w2.shape[1]
    out_dtype = x.dtype if out_dtype is None else out_dtype

    # --- pad only the hidden dim to lane width (exact: relu(0)=0, padded w2
    #     rows are 0).  D_in and D_out stay unpadded -> no extra HBM bytes. ---
    H_p = _round_up(H, LANE)
    w1_p = jnp.pad(w1, ((0, 0), (0, H_p - H))).astype(compute_dtype)
    b1_p = jnp.pad(b1.reshape(1, -1), ((0, 0), (0, H_p - H))).astype(jnp.float32)
    w2_p = jnp.pad(w2, ((0, H_p - H), (0, 0))).astype(compute_dtype)
    b2_p = b2.reshape(1, -1).astype(jnp.float32)

    # Cast is a no-op when callers already hand us compute_dtype inputs.
    x_c = x.astype(compute_dtype)

    # --- batch tiling: multiple of 8 sublanes; >=2 grid tiles when B allows
    #     (v7x has 2 TensorCores); no padded copy of x — ragged last tile. ----
    assert block_b % 8 == 0, "batch tile must be a multiple of 8 (sublanes)"
    TB = min(block_b, max(8, _round_up(-(-B // 2), 8)))
    grid = (pl.cdiv(B, TB),)

    itemsize = jnp.dtype(compute_dtype).itemsize
    cost = pl.CostEstimate(
        flops=2 * B * (D_in * H_p + H_p * D_out),
        transcendentals=B * D_out,  # tanh
        bytes_accessed=(B * D_in + w1_p.size + w2_p.size) * itemsize
        + (b1_p.size + b2_p.size) * 4
        + B * D_out * jnp.dtype(out_dtype).itemsize,
    )

    mu = pl.pallas_call(
        decoder_kernel,
        out_shape=jax.ShapeDtypeStruct((B, D_out), out_dtype),
        grid_spec=pltpu.PrefetchScalarGridSpec(
            num_scalar_prefetch=0,
            grid=grid,
            in_specs=[
                pl.BlockSpec((TB, D_in), lambda i: (i, 0)),     # x: streamed
                pl.BlockSpec((D_in, H_p), lambda i: (0, 0)),    # w1: resident
                pl.BlockSpec((1, H_p), lambda i: (0, 0)),       # b1: resident
                pl.BlockSpec((H_p, D_out), lambda i: (0, 0)),   # w2: resident
                pl.BlockSpec((1, D_out), lambda i: (0, 0)),     # b2: resident
            ],
            out_specs=pl.BlockSpec((TB, D_out), lambda i: (i, 0)),  # unpadded store
        ),
        compiler_params=pltpu.CompilerParams(
            dimension_semantics=("parallel",),   # batch tiles shard across TCs (v7x)
            vmem_limit_bytes=32 * 1024 * 1024,   # safe on v5e/v6e/v7x; usage ~1 MiB
        ),
        cost_estimate=cost,
    )(x_c, w1_p, b1_p, w2_p, b2_p)

    # Normal(mu, 1): scale is a compile-time constant; return a scalar for the
    # consumer to broadcast instead of writing a (B, D_out) array of ones.
    scale = jnp.float32(1.0)
    return mu, scale


def init_decoder_params(key, D_in, H, D_out):
    """Deterministic init mimicking nn.Linear default (U[-1/sqrt(fan_in), +])."""
    k1, k2, k3, k4 = jax.random.split(key, 4)
    lim1 = 1.0 / jnp.sqrt(jnp.float32(D_in))
    lim2 = 1.0 / jnp.sqrt(jnp.float32(H))
    # stored already transposed: (D_in, H) and (H, D_out)
    w1 = jax.random.uniform(k1, (D_in, H), jnp.float32, -lim1, lim1)
    b1 = jax.random.uniform(k2, (1, H), jnp.float32, -lim1, lim1)
    w2 = jax.random.uniform(k3, (H, D_out), jnp.float32, -lim2, lim2)
    b2 = jax.random.uniform(k4, (1, D_out), jnp.float32, -lim2, lim2)
    return w1, b1, w2, b2


if __name__ == "__main__":
    # Shapes consistent with Decoder(D_in=32, H=64, D_out=16).  B=100 with
    # block_b=32 exercises multiple grid tiles including a ragged last tile.
    B, D_in, H, D_out = 100, 32, 64, 16

    key = jax.random.PRNGKey(0)
    kx, kp = jax.random.split(key)
    x = jax.random.normal(kx, (B, D_in), jnp.float32)
    w1, b1, w2, b2 = init_decoder_params(kp, D_in, H, D_out)

    # Reference in plain JAX (same math as the PyTorch forward).
    h_ref = jnp.maximum(x @ w1 + b1, 0.0)
    mu_ref = jnp.tanh(h_ref @ w2 + b2)

    # (1) exact float32 path (multi-tile grid, ragged last tile).
    mu32, scale = decoder_forward(x, w1, b1, w2, b2,
                                  block_b=32, compute_dtype=jnp.float32)
    jax.block_until_ready(mu32)
    assert mu32.shape == (B, D_out) and mu32.dtype == jnp.float32
    assert jnp.allclose(mu32, mu_ref, atol=1e-5, rtol=1e-5)
    assert float(scale) == 1.0

    # (2) production defaults: bf16 streamed operands, f32 accumulation/epilogue.
    mu_bf, _ = decoder_forward(x, w1, b1, w2, b2)
    jax.block_until_ready(mu_bf)
    assert mu_bf.shape == (B, D_out)
    assert jnp.allclose(mu_bf.astype(jnp.float32), mu_ref, atol=5e-2, rtol=5e-2)

    # TODO(synk): torch.distributions.Normal is represented as the (mu, scale=1)
    # parameter pair; sampling/log_prob are not part of the forward hot path.
    print("KERNEL_OK")
</pallas_src>

<mosaic_0001>
module attributes {stable_mosaic.version = 11 : i64} {
  func.func @decoder_kernel(%arg0: i32, %arg1: memref<32x32xf32, #tpu.memory_space<vmem>>, %arg2: memref<32x128xf32, #tpu.memory_space<vmem>>, %arg3: memref<1x128xf32, #tpu.memory_space<vmem>>, %arg4: memref<128x16xf32, #tpu.memory_space<vmem>>, %arg5: memref<1x16xf32, #tpu.memory_space<vmem>>, %arg6: memref<32x16xf32, #tpu.memory_space<vmem>>) attributes {dimension_semantics = [#tpu.dimension_semantics<parallel>], iteration_bounds = array<i64: 4>, scalar_prefetch = 0 : i64, scratch_operands = 0 : i64, tpu.core_type = #tpu.core_type<tc>, window_params = [{transform_indices = @transform_0, window_bounds = array<i64: 32, 32>}, {pipeline_mode = #tpu.pipeline_mode<synchronous>, transform_indices = @transform_1, window_bounds = array<i64: 32, 128>}, {pipeline_mode = #tpu.pipeline_mode<synchronous>, transform_indices = @transform_2, window_bounds = array<i64: 1, 128>}, {pipeline_mode = #tpu.pipeline_mode<synchronous>, transform_indices = @transform_3, window_bounds = array<i64: 128, 16>}, {pipeline_mode = #tpu.pipeline_mode<synchronous>, transform_indices = @transform_4, window_bounds = array<i64: 1, 16>}, {transform_indices = @transform_5, window_bounds = array<i64: 32, 16>}]} {
    %c0 = arith.constant 0 : index
    %c0_0 = arith.constant 0 : index
    %0 = vector.load %arg1[%c0, %c0_0] : memref<32x32xf32, #tpu.memory_space<vmem>>, vector<32x32xf32>
    %c0_1 = arith.constant 0 : index
    %c0_2 = arith.constant 0 : index
    %1 = vector.load %arg2[%c0_1, %c0_2] : memref<32x128xf32, #tpu.memory_space<vmem>>, vector<32x128xf32>
    %cst = arith.constant dense<0.000000e+00> : vector<32x128xf32>
    %2 = tpu.matmul %0, %1, %cst {dimension_numbers = #tpu.dot_dimension_numbers<[1], [0], [0], [1], [0, 0, 1, 1], [], []>} : vector<32x32xf32>, vector<32x128xf32>, vector<32x128xf32> -> vector<32x128xf32>
    %c0_3 = arith.constant 0 : index
    %c0_4 = arith.constant 0 : index
    %3 = vector.load %arg3[%c0_3, %c0_4] : memref<1x128xf32, #tpu.memory_space<vmem>>, vector<1x128xf32>
    %4 = vector.broadcast %3 : vector<1x128xf32> to vector<32x128xf32>
    %5 = arith.addf %2, %4 : vector<32x128xf32>
    %cst_5 = arith.constant 0.000000e+00 : f32
    %6 = vector.broadcast %cst_5 : f32 to vector<32x128xf32>
    %7 = arith.maximumf %5, %6 : vector<32x128xf32>
    %c0_6 = arith.constant 0 : index
    %c0_7 = arith.constant 0 : index
    %8 = vector.load %arg4[%c0_6, %c0_7] : memref<128x16xf32, #tpu.memory_space<vmem>>, vector<128x16xf32>
    %cst_8 = arith.constant dense<0.000000e+00> : vector<32x16xf32>
    %9 = tpu.matmul %7, %8, %cst_8 {dimension_numbers = #tpu.dot_dimension_numbers<[1], [0], [0], [1], [0, 0, 1, 1], [], []>} : vector<32x128xf32>, vector<128x16xf32>, vector<32x16xf32> -> vector<32x16xf32>
    %c0_9 = arith.constant 0 : index
    %c0_10 = arith.constant 0 : index
    %10 = vector.load %arg5[%c0_9, %c0_10] : memref<1x16xf32, #tpu.memory_space<vmem>>, vector<1x16xf32>
    %11 = vector.broadcast %10 : vector<1x16xf32> to vector<32x16xf32>
    %12 = arith.addf %9, %11 : vector<32x16xf32>
    %13 = math.tanh %12 : vector<32x16xf32>
    %c0_11 = arith.constant 0 : index
    %c0_12 = arith.constant 0 : index
    %14 = vector.load %arg6[%c0_11, %c0_12] : memref<32x16xf32, #tpu.memory_space<vmem>>, vector<32x16xf32>
    tpu.vector_store %arg6[%c0_11, %c0_12], %13 {strides = array<i32>} : memref<32x16xf32, #tpu.memory_space<vmem>>, vector<32x16xf32>,
    return
  }
  func.func @transform_0(%arg0: i32) -> (i32, i32) {
    %c0_i32 = arith.constant 0 : i32
    %c0_i32_0 = arith.constant 0 : i32
    return %arg0, %c0_i32 : i32, i32
  }
  func.func @transform_1(%arg0: i32) -> (i32, i32) {
    %c0_i32 = arith.constant 0 : i32
    %c0_i32_0 = arith.constant 0 : i32
    %c0_i32_1 = arith.constant 0 : i32
    return %c0_i32, %c0_i32_0 : i32, i32
  }
  func.func @transform_2(%arg0: i32) -> (i32, i32) {
    %c0_i32 = arith.constant 0 : i32
    %c0_i32_0 = arith.constant 0 : i32
    %c0_i32_1 = arith.constant 0 : i32
    return %c0_i32, %c0_i32_0 : i32, i32
  }
  func.func @transform_3(%arg0: i32) -> (i32, i32) {
    %c0_i32 = arith.constant 0 : i32
    %c0_i32_0 = arith.constant 0 : i32
    %c0_i32_1 = arith.constant 0 : i32
    return %c0_i32, %c0_i32_0 : i32, i32
  }
  func.func @transform_4(%arg0: i32) -> (i32, i32) {
    %c0_i32 = arith.constant 0 : i32
    %c0_i32_0 = arith.constant 0 : i32
    %c0_i32_1 = arith.constant 0 : i32
    return %c0_i32, %c0_i32_0 : i32, i32
  }
  func.func @transform_5(%arg0: i32) -> (i32, i32) {
    %c0_i32 = arith.constant 0 : i32
    %c0_i32_0 = arith.constant 0 : i32
    return %arg0, %c0_i32 : i32, i32
  }
}

</mosaic_0001>

<llo_original>
// kernel: tpu_custom_call.1
$region0: #{tpu_custom_call.1}
  #allocation0 [shape = 'u32[]', space=smem, size = 0x4, offset = 0x4, fixed_abs, tag = 'smem constant byte address 0x4 - core index']
  #allocation1 [shape = 'u32[144,128]{1,0:T(1,128)}', space=vmem, size = 0x12000, scoped, tag = 'internal scratch']
  %s0 = inlined_call_operand.vmem [shape: f32[100,32], index: 0, kind: input, shape index: {}]
  %s1 = inlined_call_operand.vmem [shape: f32[32,128], index: 1, kind: input, shape index: {}]
  %s2 = inlined_call_operand.vmem [shape: f32[1,128], index: 2, kind: input, shape index: {}]
  %s3 = inlined_call_operand.vmem [shape: f32[128,16], index: 3, kind: input, shape index: {}]
  %s4 = inlined_call_operand.vmem [shape: f32[1,16], index: 4, kind: input, shape index: {}]
  %s5 = inlined_call_operand.vmem [shape: f32[100,16], index: 5, kind: output, shape index: {}]
  %s6 = sld [smem:[#allocation0]]
  $region101: #{tpu_custom_call.1} parent=0
    _
  %s8 = ssub.s32 1, %s6
  %s9 = scalar_select 0, %s8, %s6
  $region1: #{tpu_custom_call.1} parent=0
    #allocation2 [shape = 'u8[32768]{0}', space=vmem, size = 0x8000, scoped, tag = 'output window, operand 0']
    loop: start=0, step=1, limit=6
    $region2: #{tpu_custom_call.1} parent=1 // loop_pre_header
      _
    $region3: #{tpu_custom_call.1} parent=1 // loop_header
      %s11 = sphi 0, %s15
      %p12 = scmp.ge.s32.totalorder %s11, 6
      %s21 = sphi 0, %s23
      %s24 = sphi 0, %s21
      %s25 = sphi 0, %s24
      %s41 = sphi 0, %s25
      %s45 = sphi 0, %s45
      %s47 = sphi 0, %s45
      %s48 = sphi 0, %s47
      %s62 = sphi 0, %s48
      %s66 = sphi 0, %s66
      %s68 = sphi 0, %s66
      %s69 = sphi 0, %s68
      %s83 = sphi 0, %s69
      %s87 = sphi 0, %s87
      %s89 = sphi 0, %s87
      %s90 = sphi 0, %s89
      %s104 = sphi 0, %s90
      %s108 = sphi 0, %s108
      %s110 = sphi 0, %s108
      %s111 = sphi 0, %s110
      %s125 = sphi 0, %s111
      %s131 = sphi 0, %s133
      %s134 = sphi 0, %s131
      %s135 = sphi 0, %s134
      %s151 = sphi 0, %s135
    $region4: #{tpu_custom_call.1} parent=1 // loop_header_branch
      %14 = sbr.rel (%p12) target = $region8
    $region5: #{tpu_custom_call.1} parent=1 // loop_body
      %s16 = ssub.s32 %s11, 1
      %s17 = ssub.s32 %s11, 2
      %s18 = sadd.s32 %s11, 1
      %s19 = ssub.s32 %s11, %s18
      %p20 = scmp.eq.s32.totalorder %s19, 0
      %s22 = sadd.s32 %s21, 1
      %s23 = scalar_select %p20, %s21, %s22
      %p26 = pneg %p20
      %p27 = scmp.eq.s32.totalorder %s11, 3
      %p28 = por %p26, %p27
      %p29 = scmp.ne.s32.totalorder %s21, %s24
      %p30 = scmp.eq.s32.totalorder %s11, 0
      %p31 = por %p29, %p30
      %p32 = scmp.ne.s32.totalorder %s21, %s24
      %p33 = scmp.eq.s32.totalorder %s16, 3
      %p34 = por %p32, %p33
      %p35 = scmp.ne.s32.totalorder %s24, %s25
      %p36 = scmp.eq.s32.totalorder %s16, 0
      %p37 = por %p35, %p36
      %p38 = scmp.ne.s32.totalorder %s24, %s25
      %p39 = scmp.eq.s32.totalorder %s17, 3
      %p40 = por %p38, %p39
      %p42 = scmp.ne.s32.totalorder %s25, %s41
      %p43 = scmp.eq.s32.totalorder %s17, 0
      %p44 = por %p42, %p43
      %s46 = sadd.s32 %s45, 1
      %p49 = scmp.eq.s32.totalorder %s11, 3
      %p50 = scmp.ne.s32.totalorder %s45, %s47
      %p51 = scmp.eq.s32.totalorder %s11, 0
      %p52 = por %p50, %p51
      %p53 = scmp.ne.s32.totalorder %s45, %s47
      %p54 = scmp.eq.s32.totalorder %s16, 3
      %p55 = por %p53, %p54
      %p56 = scmp.ne.s32.totalorder %s47, %s48
      %p57 = scmp.eq.s32.totalorder %s16, 0
      %p58 = por %p56, %p57
      %p59 = scmp.ne.s32.totalorder %s47, %s48
      %p60 = scmp.eq.s32.totalorder %s17, 3
      %p61 = por %p59, %p60
      %p63 = scmp.ne.s32.totalorder %s48, %s62
      %p64 = scmp.eq.s32.totalorder %s17, 0
      %p65 = por %p63, %p64
      %s67 = sadd.s32 %s66, 1
      %p70 = scmp.eq.s32.totalorder %s11, 3
      %p71 = scmp.ne.s32.totalorder %s66, %s68
      %p72 = scmp.eq.s32.totalorder %s11, 0
      %p73 = por %p71, %p72
      %p74 = scmp.ne.s32.totalorder %s66, %s68
      %p75 = scmp.eq.s32.totalorder %s16, 3
      %p76 = por %p74, %p75
      %p77 = scmp.ne.s32.totalorder %s68, %s69
      %p78 = scmp.eq.s32.totalorder %s16, 0
      %p79 = por %p77, %p78
      %p80 = scmp.ne.s32.totalorder %s68, %s69
      %p81 = scmp.eq.s32.totalorder %s17, 3
      %p82 = por %p80, %p81
      %p84 = scmp.ne.s32.totalorder %s69, %s83
      %p85 = scmp.eq.s32.totalorder %s17, 0
      %p86 = por %p84, %p85
      %s88 = sadd.s32 %s87, 1
      %p91 = scmp.eq.s32.totalorder %s11, 3
      %p92 = scmp.ne.s32.totalorder %s87, %s89
      %p93 = scmp.eq.s32.totalorder %s11, 0
      %p94 = por %p92, %p93
      %p95 = scmp.ne.s32.totalorder %s87, %s89
      %p96 = scmp.eq.s32.totalorder %s16, 3
      %p97 = por %p95, %p96
      %p98 = scmp.ne.s32.totalorder %s89, %s90
      %p99 = scmp.eq.s32.totalorder %s16, 0
      %p100 = por %p98, %p99
      %p101 = scmp.ne.s32.totalorder %s89, %s90
      %p102 = scmp.eq.s32.totalorder %s17, 3
      %p103 = por %p101, %p102
      %p105 = scmp.ne.s32.totalorder %s90, %s104
      %p106 = scmp.eq.s32.totalorder %s17, 0
      %p107 = por %p105, %p106
      %s109 = sadd.s32 %s108, 1
      %p112 = scmp.eq.s32.totalorder %s11, 3
      %p113 = scmp.ne.s32.totalorder %s108, %s110
      %p114 = scmp.eq.s32.totalorder %s11, 0
      %p115 = por %p113, %p114
      %p116 = scmp.ne.s32.totalorder %s108, %s110
      %p117 = scmp.eq.s32.totalorder %s16, 3
      %p118 = por %p116, %p117
      %p119 = scmp.ne.s32.totalorder %s110, %s111
      %p120 = scmp.eq.s32.totalorder %s16, 0
      %p121 = por %p119, %p120
      %p122 = scmp.ne.s32.totalorder %s110, %s111
      %p123 = scmp.eq.s32.totalorder %s17, 3
      %p124 = por %p122, %p123
      %p126 = scmp.ne.s32.totalorder %s111, %s125
      %p127 = scmp.eq.s32.totalorder %s17, 0
      %p128 = por %p126, %p127
      %s129 = ssub.s32 %s11, %s18
      %p130 = scmp.eq.s32.totalorder %s129, 0
      %s132 = sadd.s32 %s131, 1
      %s133 = scalar_select %p130, %s131, %s132
      %p136 = pneg %p130
      %p137 = scmp.eq.s32.totalorder %s11, 3
      %p138 = por %p136, %p137
      %p139 = scmp.ne.s32.totalorder %s131, %s134
      %p140 = scmp.eq.s32.totalorder %s11, 0
      %p141 = por %p139, %p140
      %p142 = scmp.ne.s32.totalorder %s131, %s134
      %p143 = scmp.eq.s32.totalorder %s16, 3
      %p144 = por %p142, %p143
      %p145 = scmp.ne.s32.totalorder %s134, %s135
      %p146 = scmp.eq.s32.totalorder %s16, 0
      %p147 = por %p145, %p146
      %p148 = scmp.ne.s32.totalorder %s134, %s135
      %p149 = scmp.eq.s32.totalorder %s17, 3
      %p150 = por %p148, %p149
      %p152 = scmp.ne.s32.totalorder %s135, %s151
      %p153 = scmp.eq.s32.totalorder %s17, 0
      %p154 = por %p152, %p153
      %p155 = scmp.le.s32.totalorder 1, %s11
      %p156 = scmp.lt.s32.totalorder %s11, 5
      %p157 = pnand %p155, %p156
      %p158 = pneg %p157
      // Predicated region
      $region9: #{tpu_custom_call.1} parent=5 // pred_check
        _
      $region10: #{tpu_custom_call.1} parent=5 // pred_check_branch
        %160 = sbr.rel (%p157) target = $region12
      $region11: #{tpu_custom_call.1} parent=5 // pred_region
        %s161 = ssub.s32 %s11, 1
        // Predicated region
        $region13: #{tpu_custom_call.1} parent=11 // pred_check
          %p162 = pneg %p58
        $region14: #{tpu_custom_call.1} parent=11 // pred_check_branch
          %164 = sbr.rel (%p162) target = $region16
        $region15: #{tpu_custom_call.1} parent=11 // pred_region
          _
        $region16: #{tpu_custom_call.1} parent=11 // pred_fallthru
          _
        // Predicated region
        $region17: #{tpu_custom_call.1} parent=11 // pred_check
          %p165 = pneg %p79
        $region18: #{tpu_custom_call.1} parent=11 // pred_check_branch
          %167 = sbr.rel (%p165) target = $region20
        $region19: #{tpu_custom_call.1} parent=11 // pred_region
          _
        $region20: #{tpu_custom_call.1} parent=11 // pred_fallthru
          _
        // Predicated region
        $region21: #{tpu_custom_call.1} parent=11 // pred_check
          %p168 = pneg %p100
        $region22: #{tpu_custom_call.1} parent=11 // pred_check_branch
          %170 = sbr.rel (%p168) target = $region24
        $region23: #{tpu_custom_call.1} parent=11 // pred_region
          _
        $region24: #{tpu_custom_call.1} parent=11 // pred_fallthru
          _
        // Predicated region
        $region25: #{tpu_custom_call.1} parent=11 // pred_check
          %p171 = pneg %p121
        $region26: #{tpu_custom_call.1} parent=11 // pred_check_branch
          %173 = sbr.rel (%p171) target = $region28
        $region27: #{tpu_custom_call.1} parent=11 // pred_region
          _
        $region28: #{tpu_custom_call.1} parent=11 // pred_fallthru
          _
      $region12: #{tpu_custom_call.1} parent=5 // pred_fallthru
        _
      %p174 = scmp.lt.s32.totalorder %s11, 4
      // Predicated region
      $region29: #{tpu_custom_call.1} parent=5 // pred_check
        %p175 = pneg %p174
      $region30: #{tpu_custom_call.1} parent=5 // pred_check_branch
        %177 = sbr.rel (%p175) target = $region32
      $region31: #{tpu_custom_call.1} parent=5 // pred_region
        // Predicated region
        $region33: #{tpu_custom_call.1} parent=31 // pred_check
          %p178 = pneg %p31
        $region34: #{tpu_custom_call.1} parent=31 // pred_check_branch
          %180 = sbr.rel (%p178) target = $region36
        $region35: #{tpu_custom_call.1} parent=31 // pred_region
          %s181 = smul.u32 4, %s11
          %s182 = ssub.s32 13, %s181
          %p183 = scmp.lt.s32.totalorder %s182, 4
          %s184 = scalar_select %p183, %s182, 4
          %s185 = smul.u32 128, %s184
          %p186 = scmp.lt.s32.totalorder %s181, 12
          %s187 = scalar_select %p186, %s181, 12
          %s188 = smul.addr %s187, 8
          %s189 = scalar_lea.vmem %s0, %s188
          %s190 = smul.u32 4, %s11
          %s191 = ssub.s32 13, %s190
          %p192 = scmp.lt.s32.totalorder %s191, 4
          %s193 = scalar_select %p192, %s191, 4
          %s194 = smul.u32 128, %s193
        $region36: #{tpu_custom_call.1} parent=31 // pred_fallthru
          _
      $region32: #{tpu_custom_call.1} parent=5 // pred_fallthru
        _
      %p195 = scmp.le.s32.totalorder 1, %s11
      %p196 = scmp.lt.s32.totalorder %s11, 5
      %p197 = pnand %p195, %p196
      %p198 = pneg %p197
      // Predicated region
      $region37: #{tpu_custom_call.1} parent=5 // pred_check
        _
      $region38: #{tpu_custom_call.1} parent=5 // pred_check_branch
        %200 = sbr.rel (%p197) target = $region40
      $region39: #{tpu_custom_call.1} parent=5 // pred_region
        %s201 = ssub.s32 %s11, 1
        %s202 = smul.u32 4, %s16
        %s203 = ssub.s32 13, %s202
        %p204 = scmp.lt.s32.totalorder %s203, 4
        %s205 = scalar_select %p204, %s203, 4
        %s206 = smul.u32 128, %s205
        %p207 = scmp.lt.s32.totalorder %s202, 12
        %s208 = scalar_select %p207, %s202, 12
        %s209 = smul.addr %s208, 8
        %s210 = scalar_lea.vmem %s0, %s209
        %p211 = pneg %p37
        %p212 = pneg %p34
        %p213 = pneg %p58
        %p214 = pneg %p55
        %p215 = pneg %p79
        %p216 = pneg %p76
        %p217 = pneg %p100
        %p218 = pneg %p97
        %p219 = pneg %p121
        %p220 = pneg %p118
        %p221 = pneg %p147
        %p222 = pneg %p144
        %s223 = sand.u32 %s134, 1
        %s224 = sand.u32 %s134, 1
        %s225 = smul.addr %s224, 32
        %s226 = scalar_lea.vmem [#allocation2], %s225
        %s227 = smul.u32 4, %s16
        %s228 = ssub.s32 13, %s227
        %p229 = scmp.lt.s32.totalorder %s228, 4
        %s230 = scalar_select %p229, %s228, 4
        %s231 = smul.u32 128, %s230
        %p232 = scmp.lt.s32.totalorder %s227, 12
        %s233 = scalar_select %p232, %s227, 12
        %s234 = smul.addr %s233, 8
        %s235 = scalar_lea.vmem %s0, %s234
        %s236 = smul.u32 4, %s16
        %s237 = ssub.s32 13, %s236
        %p238 = scmp.lt.s32.totalorder %s237, 4
        %s239 = scalar_select %p238, %s237, 4
        %s240 = smul.u32 128, %s239
        %s241 = smul.u32 4, %s16
        %s242 = ssub.s32 13, %s241
        %p243 = scmp.lt.s32.totalorder %s242, 4
        %s244 = scalar_select %p243, %s242, 4
        %s245 = smul.u32 128, %s244
        %v246 = vld [vmem:[%s235] sm:$0xff]
        %v247 = vld [vmem:[%s235 + $0x8] sm:$0xff]
        %v248 = vld [vmem:[%s235 + $0x10] sm:$0xff]
        %v249 = vld [vmem:[%s235 + $0x18] sm:$0xff]
        %v250 = vld [vmem:[%s1] sm:$0xff]
        %v251 = vld [vmem:[%s1 + $0x8] sm:$0xff]
        %v252 = vld [vmem:[%s1 + $0x10] sm:$0xff]
        %v253 = vld [vmem:[%s1 + $0x18] sm:$0xff]
        %v254 = vld [vmem:[%s2] sm:$0x1]
        %v256 = vlaneseq
        %v257 = vshrl.u32 %v256, 7
        %v258 = vsub.s32 0, %v257
        %v259 = vrot.slane %v254, %v258
        %vm261 = vcmask 261120
        %v263 = vsel %vm261, %v246, 0
        %v266 = vsel %vm261, %v247, 0
        %v269 = vsel %vm261, %v248, 0
        %v272 = vsel %vm261, %v249, 0
        %274 = vmatprep.subr.mxu0 0.0
        %275 = vmatpush1.msra.mxu0 0.0
        %276 = vmatprep.subr.mxu0 0.0
        %277 = vmatpush1.msra.mxu0 0.0
        %278 = vmatprep.subr.mxu0 0.0
        %279 = vmatpush1.msra.mxu0 0.0
        %280 = vmatprep.subr.mxu0 0.0
        %281 = vmatpush1.msra.mxu0 0.0
        %282 = vmatprep.subr.mxu0 0.0
        %283 = vmatpush1.msra.mxu0 0.0
        %284 = vmatprep.subr.mxu0 0.0
        %285 = vmatpush1.msra.mxu0 0.0
        %286 = vmatprep.subr.mxu0 0.0
        %287 = vmatpush1.msra.mxu0 0.0
        %288 = vmatprep.subr.mxu0 0.0
        %289 = vmatpush1.msra.mxu0 0.0
        %290 = vmatprep.subr.mxu0 0.0
        %291 = vmatpush1.msra.mxu0 0.0
        %292 = vmatprep.subr.mxu0 0.0
        %293 = vmatpush1.msra.mxu0 0.0
        %294 = vmatprep.subr.mxu0 0.0
        %295 = vmatpush1.msra.mxu0 0.0
        %296 = vmatprep.subr.mxu0 0.0
        %297 = vmatpush1.msra.mxu0 0.0
        %298 = vmatprep.subr.mxu0 0.0
        %299 = vmatpush1.msra.mxu0 %v253
        %300 = vmatprep.subr.mxu0 0.0
        %301 = vmatpush1.msra.mxu0 %v252
        %302 = vmatprep.subr.mxu0 0.0
        %303 = vmatpush1.msra.mxu0 %v251
        %304 = vmatprep.subr.mxu0 0.0
        %305 = vmatpush1.msra.mxu0 %v250
        %306 = vmatprep.subr.mxu0 0.0
        %307 = vmatpush2.msra.mxu0 0.0
        %308 = vmatprep.subr.mxu0 0.0
        %309 = vmatpush2.msra.mxu0 0.0
        %310 = vmatprep.subr.mxu0 0.0
        %311 = vmatpush2.msra.mxu0 0.0
        %312 = vmatprep.subr.mxu0 0.0
        %313 = vmatpush2.msra.mxu0 0.0
        %314 = vmatprep.subr.mxu0 0.0
        %315 = vmatpush2.msra.mxu0 0.0
        %316 = vmatprep.subr.mxu0 0.0
        %317 = vmatpush2.msra.mxu0 0.0
        %318 = vmatprep.subr.mxu0 0.0
        %319 = vmatpush2.msra.mxu0 0.0
        %320 = vmatprep.subr.mxu0 0.0
        %321 = vmatpush2.msra.mxu0 0.0
        %322 = vmatprep.subr.mxu0 0.0
        %323 = vmatpush2.msra.mxu0 0.0
        %324 = vmatprep.subr.mxu0 0.0
        %325 = vmatpush2.msra.mxu0 0.0
        %326 = vmatprep.subr.mxu0 0.0
        %327 = vmatpush2.msra.mxu0 0.0
        %328 = vmatprep.subr.mxu0 0.0
        %329 = vmatpush2.msra.mxu0 0.0
        %330 = vmatprep.subr.mxu0 0.0
        %331 = vmatpush2.msra.mxu0 0.0
        %332 = vmatprep.subr.mxu0 0.0
        %333 = vmatpush2.msra.mxu0 0.0
        %334 = vmatprep.subr.mxu0 0.0
        %335 = vmatpush2.msra.mxu0 0.0
        %336 = vmatprep.subr.mxu0 0.0
        %337 = vmatpush2.msra.mxu0 0.0
        %338 = vmatprep.mubr.f32.mxu0 0.0
        %339 = vmatmul.mubr.f32.gmra.mxu0 %v263
        %v340 = vpop.f32.mrf.mxu0
        %v341 = vadd.f32 %v259, %v340
        %v342 = vpop.f32.mrf.mxu0
        %343 = vmatprep.mubr.f32.mxu0 0.0
        %344 = vmatmul.mubr.f32.gmra.mxu0 %v266
        %v345 = vpop.f32.mrf.mxu0
        %v346 = vadd.f32 %v259, %v345
        %v347 = vpop.f32.mrf.mxu0
        %348 = vmatprep.mubr.f32.mxu0 0.0
        %349 = vmatmul.mubr.f32.gmra.mxu0 %v269
        %v350 = vpop.f32.mrf.mxu0
        %v351 = vadd.f32 %v259, %v350
        %v352 = vpop.f32.mrf.mxu0
        %353 = vmatprep.mubr.f32.mxu0 0.0
        %354 = vmatmul.mubr.f32.gmra.mxu0 %v272
        %v355 = vpop.f32.mrf.mxu0
        %v356 = vadd.f32 %v259, %v355
        %v357 = vpop.f32.mrf.mxu0
        %358 = vdwg.mxu0
        %v359 = vmax.f32 %v341, 0.0
        %v360 = vmax.f32 %v346, 0.0
        %v361 = vmax.f32 %v351, 0.0
        %v362 = vmax.f32 %v356, 0.0
        %v363 = vld [vmem:[%s3] sm:$0xff]
        %v364 = vld [vmem:[%s3 + $0x8] sm:$0xff]
        %v365 = vld [vmem:[%s3 + $0x10] sm:$0xff]
        %v366 = vld [vmem:[%s3 + $0x18] sm:$0xff]
        %v367 = vld [vmem:[%s3 + $0x20] sm:$0xff]
        %v368 = vld [vmem:[%s3 + $0x28] sm:$0xff]
        %v369 = vld [vmem:[%s3 + $0x30] sm:$0xff]
        %v370 = vld [vmem:[%s3 + $0x38] sm:$0xff]
        %v371 = vld [vmem:[%s3 + $0x40] sm:$0xff]
        %v372 = vld [vmem:[%s3 + $0x48] sm:$0xff]
        %v373 = vld [vmem:[%s3 + $0x50] sm:$0xff]
        %v374 = vld [vmem:[%s3 + $0x58] sm:$0xff]
        %v375 = vld [vmem:[%s3 + $0x60] sm:$0xff]
        %v376 = vld [vmem:[%s3 + $0x68] sm:$0xff]
        %v377 = vld [vmem:[%s3 + $0x70] sm:$0xff]
        %v378 = vld [vmem:[%s3 + $0x78] sm:$0xff]
        %v379 = vld [vmem:[%s4] sm:$0x1]
        %v381 = vlaneseq
        %v382 = vshrl.u32 %v381, 7
        %v383 = vsub.s32 0, %v382
        %v384 = vrot.slane %v379, %v383
        %386 = vmatprep.subr.mxu0 0.0
        %387 = vmatpush1.msra.mxu0 %v378
        %388 = vmatprep.subr.mxu0 0.0
        %389 = vmatpush1.msra.mxu0 %v377
        %390 = vmatprep.subr.mxu0 0.0
        %391 = vmatpush1.msra.mxu0 %v376
        %392 = vmatprep.subr.mxu0 0.0
        %393 = vmatpush1.msra.mxu0 %v375
        %394 = vmatprep.subr.mxu0 0.0
        %395 = vmatpush1.msra.mxu0 %v374
        %396 = vmatprep.subr.mxu0 0.0
        %397 = vmatpush1.msra.mxu0 %v373
        %398 = vmatprep.subr.mxu0 0.0
        %399 = vmatpush1.msra.mxu0 %v372
        %400 = vmatprep.subr.mxu0 0.0
        %401 = vmatpush1.msra.mxu0 %v371
        %402 = vmatprep.subr.mxu0 0.0
        %403 = vmatpush1.msra.mxu0 %v370
        %404 = vmatprep.subr.mxu0 0.0
        %405 = vmatpush1.msra.mxu0 %v369
        %406 = vmatprep.subr.mxu0 0.0
        %407 = vmatpush1.msra.mxu0 %v368
        %408 = vmatprep.subr.mxu0 0.0
        %409 = vmatpush1.msra.mxu0 %v367
        %410 = vmatprep.subr.mxu0 0.0
        %411 = vmatpush1.msra.mxu0 %v366
        %412 = vmatprep.subr.mxu0 0.0
        %413 = vmatpush1.msra.mxu0 %v365
        %414 = vmatprep.subr.mxu0 0.0
        %415 = vmatpush1.msra.mxu0 %v364
        %416 = vmatprep.subr.mxu0 0.0
        %417 = vmatpush1.msra.mxu0 %v363
        %418 = vmatprep.subr.mxu0 0.0
        %419 = vmatpush2.msra.mxu0 0.0
        %420 = vmatprep.subr.mxu0 0.0
        %421 = vmatpush2.msra.mxu0 0.0
        %422 = vmatprep.subr.mxu0 0.0
        %423 = vmatpush2.msra.mxu0 0.0
        %424 = vmatprep.subr.mxu0 0.0
        %425 = vmatpush2.msra.mxu0 0.0
        %426 = vmatprep.subr.mxu0 0.0
        %427 = vmatpush2.msra.mxu0 0.0
        %428 = vmatprep.subr.mxu0 0.0
        %429 = vmatpush2.msra.mxu0 0.0
        %430 = vmatprep.subr.mxu0 0.0
        %431 = vmatpush2.msra.mxu0 0.0
        %432 = vmatprep.subr.mxu0 0.0
        %433 = vmatpush2.msra.mxu0 0.0
        %434 = vmatprep.subr.mxu0 0.0
        %435 = vmatpush2.msra.mxu0 0.0
        %436 = vmatprep.subr.mxu0 0.0
        %437 = vmatpush2.msra.mxu0 0.0
        %438 = vmatprep.subr.mxu0 0.0
        %439 = vmatpush2.msra.mxu0 0.0
        %440 = vmatprep.subr.mxu0 0.0
        %441 = vmatpush2.msra.mxu0 0.0
        %442 = vmatprep.subr.mxu0 0.0
        %443 = vmatpush2.msra.mxu0 0.0
        %444 = vmatprep.subr.mxu0 0.0
        %445 = vmatpush2.msra.mxu0 0.0
        %446 = vmatprep.subr.mxu0 0.0
        %447 = vmatpush2.msra.mxu0 0.0
        %448 = vmatprep.subr.mxu0 0.0
        %449 = vmatpush2.msra.mxu0 0.0
        %450 = vmatprep.mubr.f32.mxu0 0.0
        %451 = vmatmul.mubr.f32.gmra.mxu0 %v359
        %v452 = vpop.f32.mrf.mxu0
        %v453 = vadd.f32 %v384, %v452
        %v454 = vpop.f32.mrf.mxu0
        %455 = vmatprep.mubr.f32.mxu0 0.0
        %456 = vmatmul.mubr.f32.gmra.mxu0 %v360
        %v457 = vpop.f32.mrf.mxu0
        %v458 = vadd.f32 %v384, %v457
        %v459 = vpop.f32.mrf.mxu0
        %460 = vmatprep.mubr.f32.mxu0 0.0
        %461 = vmatmul.mubr.f32.gmra.mxu0 %v361
        %v462 = vpop.f32.mrf.mxu0
        %v463 = vadd.f32 %v384, %v462
        %v464 = vpop.f32.mrf.mxu0
        %465 = vmatprep.mubr.f32.mxu0 0.0
        %466 = vmatmul.mubr.f32.gmra.mxu0 %v362
        %v467 = vpop.f32.mrf.mxu0
        %v468 = vadd.f32 %v384, %v467
        %v469 = vpop.f32.mrf.mxu0
        %470 = vdwg.mxu0
        %v471 = vtanh.pop %v453
        %v472 = vtanh.pop %v458
        %v473 = vtanh.pop %v463
        %v474 = vtanh.pop %v468
        %vm475 = vcmask 130048
        %476 = vst.msk [vmem:[%s226] sm:$0xff] %vm475, %v471
        %477 = vst.msk [vmem:[%s226 + $0x8] sm:$0xff] %vm475, %v472
        %478 = vst.msk [vmem:[%s226 + $0x10] sm:$0xff] %vm475, %v473
        %479 = vst.msk [vmem:[%s226 + $0x18] sm:$0xff] %vm475, %v474
        %s480 = sand.u32 %s134, 1
        %s481 = sand.u32 %s134, 1
        %s482 = smul.addr %s481, 32
        %s483 = scalar_lea.vmem [#allocation2], %s482
        // Predicated region
        $region41: #{tpu_custom_call.1} parent=39 // pred_check
          %p484 = pneg %p144
        $region42: #{tpu_custom_call.1} parent=39 // pred_check_branch
          %486 = sbr.rel (%p484) target = $region44
        $region43: #{tpu_custom_call.1} parent=39 // pred_region
          %s487 = smul.u32 4, %s16
          %s488 = ssub.s32 13, %s487
          %p489 = scmp.lt.s32.totalorder %s488, 4
          %s490 = scalar_select %p489, %s488, 4
          %s491 = smul.u32 128, %s490
          %p492 = scmp.ne.s32.totalorder 0, %s491
          %s493 = smul.addr %s487, 8
          %s494 = scalar_lea.vmem %s5, %s493
          // Predicated region
          $region45: #{tpu_custom_call.1} parent=43 // pred_check
            %p495 = pneg %p492
          $region46: #{tpu_custom_call.1} parent=43 // pred_check_branch
            %497 = sbr.rel (%p495) target = $region48
          $region47: #{tpu_custom_call.1} parent=43 // pred_region
            // Predicated region
            $region49: #{tpu_custom_call.1} parent=47 // pred_check
              _
            $region50: #{tpu_custom_call.1} parent=47 // pred_check_branch
              %499 = sbr.rel (0) target = $region52
            $region51: #{tpu_custom_call.1} parent=47 // pred_region
              // Predicated region
              $region71: #{tpu_custom_call.1} parent=51 // pred_check
                _
              $region72: #{tpu_custom_call.1} parent=51 // pred_check_branch
                %555 = sbr.rel (0) target = $region74
              $region73: #{tpu_custom_call.1} parent=51 // pred_region
                %s556 = sshrl.u32 %s490, 2
                // While loop
                $region75: #{tpu_custom_call.1} parent=73 // loop_pre_header
                  _
                $region76: #{tpu_custom_call.1} parent=73 // loop_header
                  %s558 = sphi 0, %s560
                  %p559 = scmp.ge.s32.totalorder %s558, %s556
                  %s563 = sphi 0, %s576
                  %s564 = sphi %s483, %s579
                  %s565 = sphi %s494, %s580
                $region77: #{tpu_custom_call.1} parent=73 // loop_header_branch
                  %562 = sbr.rel (%p559) target = $region81
                $region78: #{tpu_custom_call.1} parent=73 // loop_body
                  %v566 = vld [vmem:[%s564] sm:$0xff]
                  %567 = vst [vmem:[%s565] sm:$0xff] %v566
                  %v568 = vld [vmem:[%s564 + $0x8] sm:$0xff]
                  %569 = vst [vmem:[%s565 + $0x8] sm:$0xff] %v568
                  %v570 = vld [vmem:[%s564 + $0x10] sm:$0xff]
                  %571 = vst [vmem:[%s565 + $0x10] sm:$0xff] %v570
                  %v572 = vld [vmem:[%s564 + $0x18] sm:$0xff]
                  %573 = vst [vmem:[%s565 + $0x18] sm:$0xff] %v572
                  %s574 = sadd.s32 1, %s563
                  %p575 = scmp.ge.s32.totalorder %s574, %s556
                  %s576 = scalar_select %p575, 0, %s574
                  %s577 = smul.u32 %s576, 32
                  %s578 = smul.u32 %s576, 32
                  %s579 = scalar_lea.vmem %s483, %s577 [#allocation2]
                  %s580 = scalar_lea.vmem %s494, %s578
                $region79: #{tpu_custom_call.1} parent=73 // loop_footer
                  %s560 = sadd.s32 %s558, 1
                $region80: #{tpu_custom_call.1} parent=73 // loop_footer_branch
                  %557 = sbr.rel target = $region76
                $region81: #{tpu_custom_call.1} parent=73 // loop_exit
                  _
                %s581 = sshrl.u32 %s490, 2
                %s582 = sand.u32 %s490, 3
                %s583 = smul.u32 %s581, 4
                %s584 = smul.u32 8, %s583
                %s585 = scalar_lea.vmem %s483, %s584 [#allocation2]
                %s586 = smul.u32 8, %s583
                %s587 = scalar_lea.vmem %s494, %s586
                // While loop
                $region82: #{tpu_custom_call.1} parent=73 // loop_pre_header
                  _
                $region83: #{tpu_custom_call.1} parent=73 // loop_header
                  %s589 = sphi 0, %s591
                  %p590 = scmp.ge.s32.totalorder %s589, %s582
                  %s594 = sphi 0, %s601
                  %s595 = sphi %s585, %s604
                  %s596 = sphi %s587, %s605
                $region84: #{tpu_custom_call.1} parent=73 // loop_header_branch
                  %593 = sbr.rel (%p590) target = $region88
                $region85: #{tpu_custom_call.1} parent=73 // loop_body
                  %v597 = vld [vmem:[%s595] sm:$0xff]
                  %598 = vst [vmem:[%s596] sm:$0xff] %v597
                  %s599 = sadd.s32 1, %s594
                  %p600 = scmp.ge.s32.totalorder %s599, %s582
                  %s601 = scalar_select %p600, 0, %s599
                  %s602 = smul.u32 %s601, 8
                  %s603 = smul.u32 %s601, 8
                  %s604 = scalar_lea.vmem %s585, %s602 [#allocation2]
                  %s605 = scalar_lea.vmem %s587, %s603
                $region86: #{tpu_custom_call.1} parent=73 // loop_footer
                  %s591 = sadd.s32 %s589, 1
                $region87: #{tpu_custom_call.1} parent=73 // loop_footer_branch
                  %588 = sbr.rel target = $region83
                $region88: #{tpu_custom_call.1} parent=73 // loop_exit
                  _
              $region74: #{tpu_custom_call.1} parent=51 // pred_fallthru
                _
              // Predicated region
              $region89: #{tpu_custom_call.1} parent=51 // pred_check
                _
              $region90: #{tpu_custom_call.1} parent=51 // pred_check_branch
                %607 = sbr.rel target = $region92
              $region91: #{tpu_custom_call.1} parent=51 // pred_region
                _
              $region92: #{tpu_custom_call.1} parent=51 // pred_fallthru
                _
            $region52: #{tpu_custom_call.1} parent=47 // pred_fallthru
              _
            // Predicated region
            $region53: #{tpu_custom_call.1} parent=47 // pred_check
              _
            $region54: #{tpu_custom_call.1} parent=47 // pred_check_branch
              %501 = sbr.rel target = $region56
            $region55: #{tpu_custom_call.1} parent=47 // pred_region
              %s503 = ssub.s32 256, 1
              %s504 = sshrl.u32 %s490, 2
              // While loop
              $region57: #{tpu_custom_call.1} parent=55 // loop_pre_header
                _
              $region58: #{tpu_custom_call.1} parent=55 // loop_header
                %s506 = sphi 0, %s508
                %p507 = scmp.ge.s32.totalorder %s506, %s504
                %s511 = sphi 0, %s524
                %s512 = sphi %s483, %s527
                %s513 = sphi %s494, %s528
              $region59: #{tpu_custom_call.1} parent=55 // loop_header_branch
                %510 = sbr.rel (%p507) target = $region63
              $region60: #{tpu_custom_call.1} parent=55 // loop_body
                %v514 = vld [vmem:[%s512] sm:%s503]
                %515 = vst [vmem:[%s513] sm:%s503] %v514
                %v516 = vld [vmem:[%s512 + $0x8] sm:%s503]
                %517 = vst [vmem:[%s513 + $0x8] sm:%s503] %v516
                %v518 = vld [vmem:[%s512 + $0x10] sm:%s503]
                %519 = vst [vmem:[%s513 + $0x10] sm:%s503] %v518
                %v520 = vld [vmem:[%s512 + $0x18] sm:%s503]
                %521 = vst [vmem:[%s513 + $0x18] sm:%s503] %v520
                %s522 = sadd.s32 1, %s511
                %p523 = scmp.ge.s32.totalorder %s522, %s504
                %s524 = scalar_select %p523, 0, %s522
                %s525 = smul.u32 %s524, 32
                %s526 = smul.u32 %s524, 32
                %s527 = scalar_lea.vmem %s483, %s525 [#allocation2]
                %s528 = scalar_lea.vmem %s494, %s526
              $region61: #{tpu_custom_call.1} parent=55 // loop_footer
                %s508 = sadd.s32 %s506, 1
              $region62: #{tpu_custom_call.1} parent=55 // loop_footer_branch
                %505 = sbr.rel target = $region58
              $region63: #{tpu_custom_call.1} parent=55 // loop_exit
                _
              %s529 = sshrl.u32 %s490, 2
              %s530 = sand.u32 %s490, 3
              %s531 = smul.u32 %s529, 4
              %s532 = smul.u32 8, %s531
              %s533 = scalar_lea.vmem %s483, %s532 [#allocation2]
              %s534 = smul.u32 8, %s531
              %s535 = scalar_lea.vmem %s494, %s534
              // While loop
              $region64: #{tpu_custom_call.1} parent=55 // loop_pre_header
                _
              $region65: #{tpu_custom_call.1} parent=55 // loop_header
                %s537 = sphi 0, %s539
                %p538 = scmp.ge.s32.totalorder %s537, %s530
                %s542 = sphi 0, %s549
                %s543 = sphi %s533, %s552
                %s544 = sphi %s535, %s553
              $region66: #{tpu_custom_call.1} parent=55 // loop_header_branch
                %541 = sbr.rel (%p538) target = $region70
              $region67: #{tpu_custom_call.1} parent=55 // loop_body
                %v545 = vld [vmem:[%s543] sm:%s503]
                %546 = vst [vmem:[%s544] sm:%s503] %v545
                %s547 = sadd.s32 1, %s542
                %p548 = scmp.ge.s32.totalorder %s547, %s530
                %s549 = scalar_select %p548, 0, %s547
                %s550 = smul.u32 %s549, 8
                %s551 = smul.u32 %s549, 8
                %s552 = scalar_lea.vmem %s533, %s550 [#allocation2]
                %s553 = scalar_lea.vmem %s535, %s551
              $region68: #{tpu_custom_call.1} parent=55 // loop_footer
                %s539 = sadd.s32 %s537, 1
              $region69: #{tpu_custom_call.1} parent=55 // loop_footer_branch
                %536 = sbr.rel target = $region65
              $region70: #{tpu_custom_call.1} parent=55 // loop_exit
                _
            $region56: #{tpu_custom_call.1} parent=47 // pred_fallthru
              _
          $region48: #{tpu_custom_call.1} parent=43 // pred_fallthru
            _
          %608 = vnop
        $region44: #{tpu_custom_call.1} parent=39 // pred_fallthru
          _
      $region40: #{tpu_custom_call.1} parent=5 // pred_fallthru
        _
      %p609 = scmp.le.s32.totalorder 2, %s11
      // Predicated region
      $region93: #{tpu_custom_call.1} parent=5 // pred_check
        %p610 = pneg %p609
      $region94: #{tpu_custom_call.1} parent=5 // pred_check_branch
        %612 = sbr.rel (%p610) target = $region96
      $region95: #{tpu_custom_call.1} parent=5 // pred_region
        %s613 = ssub.s32 %s11, 2
        // Predicated region
        $region97: #{tpu_custom_call.1} parent=95 // pred_check
          %p614 = pneg %p150
        $region98: #{tpu_custom_call.1} parent=95 // pred_check_branch
          %616 = sbr.rel (%p614) target = $region100
        $region99: #{tpu_custom_call.1} parent=95 // pred_region
          %s617 = sand.u32 %s135, 1
          %s618 = sand.u32 %s135, 1
          %s619 = smul.addr %s618, 32
          %s620 = scalar_lea.vmem [#allocation2], %s619
        $region100: #{tpu_custom_call.1} parent=95 // pred_fallthru
          _
      $region96: #{tpu_custom_call.1} parent=5 // pred_fallthru
        _
    $region6: #{tpu_custom_call.1} parent=1 // loop_footer
      %s15 = sadd.s32 1, %s11
    $region7: #{tpu_custom_call.1} parent=1 // loop_footer_branch
      %10 = sbr.rel target = $region3
    $region8: #{tpu_custom_call.1} parent=1 // loop_exit
      _

</llo_original>
